<compile_context>
chip_gen: v7x
topology: tpu7x:2x2x1
jax: 0.10.0
libtpu: 0.0.40
codegen_flags: <defaults>
</compile_context>

<pallas_src>
import jax
import jax.numpy as jnp
from jax.experimental import pallas as pl
from jax.experimental.pallas import tpu as pltpu


_SINGLE_BLOCK_BYTES = 2 * 1024 * 1024   # whole-problem-in-VMEM fast-path cap
_VMEM_LIMIT_BYTES = 32 * 1024 * 1024    # explicit scoped-VMEM limit (all gens)


def _prod(xs):
    p = 1
    for d in xs:
        p *= d
    return p


def _pick_k_tile(k, cap):
    """Largest multiple of 128 <= cap that divides k, else None."""
    for c in range(cap // 128, 0, -1):
        if k % (c * 128) == 0:
            return c * 128
    return None


# ---------------------------------------------------------------------------
# Kernels
# ---------------------------------------------------------------------------
def _linear_block_kernel(x_ref, w_ref, b_ref, o_ref):
    # One MXU pass: y = x @ w + b.  f32 accumulation, cast only at the store.
    y = jnp.dot(x_ref[...], w_ref[...], preferred_element_type=jnp.float32)
    o_ref[...] = (y + b_ref[...].astype(jnp.float32)).astype(o_ref.dtype)


def _linear_kacc_f32_kernel(x_ref, w_ref, b_ref, o_ref):
    # f32 output: accumulate directly into the resident output block (its block
    # index ignores k), so no VMEM scratch is needed.
    k = pl.program_id(2)

    @pl.when(k == 0)
    def _():
        o_ref[...] = jnp.zeros_like(o_ref)

    o_ref[...] += jnp.dot(x_ref[...], w_ref[...],
                          preferred_element_type=jnp.float32)

    @pl.when(k == pl.num_programs(2) - 1)
    def _():
        o_ref[...] += b_ref[...].astype(jnp.float32)


def _linear_kacc_scratch_kernel(x_ref, w_ref, b_ref, o_ref, acc_ref):
    # Low-precision output: keep an f32 accumulator, cast once at the end.
    k = pl.program_id(2)

    @pl.when(k == 0)
    def _():
        acc_ref[...] = jnp.zeros_like(acc_ref)

    acc_ref[...] += jnp.dot(x_ref[...], w_ref[...],
                            preferred_element_type=jnp.float32)

    @pl.when(k == pl.num_programs(2) - 1)
    def _():
        o_ref[...] = (acc_ref[...] + b_ref[...].astype(jnp.float32)).astype(o_ref.dtype)


# ---------------------------------------------------------------------------
# Wrappers
# ---------------------------------------------------------------------------
def prepare_linear_params(weight, bias):
    """One-time parameter prep (call at init, not per forward).

    PyTorch stores W as (OUT, IN); the MXU wants (IN, OUT) so we transpose once
    here instead of paying an HBM pass on every call.
    """
    return jnp.asarray(weight).T, jnp.asarray(bias).reshape(1, -1)


def linear_pallas(x, w_kn, b2d, *, tm=None, tn=None, tk=None):
    """y = x @ w_kn + b  ==  F.linear(x, W, b).contiguous() with w_kn = W.T."""
    *lead, K = x.shape
    Kw, N = w_kn.shape
    assert Kw == K, (Kw, K)
    m = _prod(lead) if lead else 1
    x2d = x.reshape(m, K)
    out_dtype = x.dtype
    itemsize = jnp.dtype(out_dtype).itemsize
    force_tiled = any(t is not None for t in (tm, tn, tk))

    total_bytes = (m * K + K * N + N + m * N) * itemsize

    # ---- fast path: the whole problem is a single VMEM block ---------------
    if not force_tiled and total_bytes <= _SINGLE_BLOCK_BYTES:
        out = pl.pallas_call(
            _linear_block_kernel,
            out_shape=jax.ShapeDtypeStruct((m, N), out_dtype),
        )(x2d, w_kn, b2d)
        return out.reshape(*lead, N)

    # ---- general tiled path (no per-call padding of x / W / b) -------------
    if tm is None:
        tm = m if m <= 512 else 512                      # mult-of-8 or == m
    if tn is None:
        tn_cap = 512
        if pl.cdiv(m, tm) == 1 and N > 256:
            tn_cap = 256                                 # keep >=2 N programs (v7x 2 TCs)
        tn = N if N <= tn_cap else tn_cap                # mult-of-128 or == N
    if tk is None:
        tk = K if K <= 2048 else _pick_k_tile(K, 2048)

    x_k, w_k, Kp = x2d, w_kn, K
    if tk is None or Kp % tk != 0:
        # Rare fallback: no aligned divisor of K (or an override that doesn't
        # divide it).  Pad K once so no partial-K tile reads garbage into the
        # reduction; M/N edges never need padding (garbage only lands in
        # output rows/cols that are dropped on write).
        tk = tk or 2048
        Kp = pl.cdiv(K, tk) * tk
        x_k = jnp.pad(x2d, ((0, 0), (0, Kp - K)))
        w_k = jnp.pad(w_kn, ((0, Kp - K), (0, 0)))

    grid_m = pl.cdiv(m, tm)
    grid_n = pl.cdiv(N, tn)
    grid_k = Kp // tk

    cost = pl.CostEstimate(
        flops=2 * m * Kp * N,
        transcendentals=0,
        bytes_accessed=(m * Kp + Kp * N + N + m * N) * itemsize,
    )

    if grid_k == 1:
        # tk covers all of K: no reduction axis, no accumulator at all.
        out = pl.pallas_call(
            _linear_block_kernel,
            out_shape=jax.ShapeDtypeStruct((m, N), out_dtype),
            grid=(grid_m, grid_n),
            in_specs=[
                pl.BlockSpec((tm, tk), lambda i, j: (i, 0)),
                pl.BlockSpec((tk, tn), lambda i, j: (0, j)),
                pl.BlockSpec((1, tn), lambda i, j: (0, j)),
            ],
            out_specs=pl.BlockSpec((tm, tn), lambda i, j: (i, j)),
            compiler_params=pltpu.CompilerParams(
                dimension_semantics=("parallel", "parallel"),
                vmem_limit_bytes=_VMEM_LIMIT_BYTES,
            ),
            cost_estimate=cost,
        )(x_k, w_k, b2d)
    else:
        if out_dtype == jnp.float32:
            kernel, scratch = _linear_kacc_f32_kernel, []
        else:
            kernel, scratch = _linear_kacc_scratch_kernel, [pltpu.VMEM((tm, tn), jnp.float32)]
        out = pl.pallas_call(
            kernel,
            out_shape=jax.ShapeDtypeStruct((m, N), out_dtype),
            grid=(grid_m, grid_n, grid_k),
            in_specs=[
                pl.BlockSpec((tm, tk), lambda i, j, k: (i, k)),
                pl.BlockSpec((tk, tn), lambda i, j, k: (k, j)),
                pl.BlockSpec((1, tn), lambda i, j, k: (0, j)),
            ],
            out_specs=pl.BlockSpec((tm, tn), lambda i, j, k: (i, j)),
            scratch_shapes=scratch,
            compiler_params=pltpu.CompilerParams(
                dimension_semantics=("parallel", "parallel", "arbitrary"),
                vmem_limit_bytes=_VMEM_LIMIT_BYTES,
            ),
            cost_estimate=cost,
        )(x_k, w_k, b2d)

    return out.reshape(*lead, N)


# ---------------------------------------------------------------------------
# Self-test
# ---------------------------------------------------------------------------
if __name__ == "__main__":
    key = jax.random.PRNGKey(0)
    kx, kw, kb, kx2, kw2, kb2 = jax.random.split(key, 6)

    # --- the literal module: Linear(2, 3) applied to x0 of shape (1, 2, 2) ---
    IN_FEATURES, OUT_FEATURES = 2, 3
    bound = 1.0 / (IN_FEATURES ** 0.5)
    weight = jax.random.uniform(kw, (OUT_FEATURES, IN_FEATURES), jnp.float32, -bound, bound)
    bias = jax.random.uniform(kb, (OUT_FEATURES,), jnp.float32, -bound, bound)
    x0 = jax.random.normal(kx, (1, 2, 2), jnp.float32)

    w_kn, b2d = prepare_linear_params(weight, bias)      # one-time prep
    out = jax.block_until_ready(linear_pallas(x0, w_kn, b2d))
    ref = x0 @ weight.T + bias
    assert out.shape == (1, 2, 3)
    assert jnp.allclose(out, ref, atol=1e-5, rtol=1e-5)

    # --- exercise the tiled path (same code, realistic shapes) ---------------
    IN2, OUT2 = 512, 1024
    w2 = jax.random.normal(kw2, (OUT2, IN2), jnp.float32) * 0.02
    b2 = jax.random.normal(kb2, (OUT2,), jnp.float32) * 0.02
    x2 = jax.random.normal(kx2, (4, 128, IN2), jnp.float32)
    w2_kn, b2_2d = prepare_linear_params(w2, b2)

    out2 = jax.block_until_ready(linear_pallas(x2, w2_kn, b2_2d))
    ref2 = x2 @ w2.T + b2
    assert jnp.allclose(out2, ref2, atol=1e-2, rtol=1e-2)

    # --- exercise the K-reduction (accumulate-into-output) path --------------
    out3 = jax.block_until_ready(linear_pallas(x2, w2_kn, b2_2d, tm=256, tn=256, tk=256))
    assert jnp.allclose(out3, ref2, atol=1e-2, rtol=1e-2)

    print("KERNEL_OK")
</pallas_src>

<mosaic_0001>
module attributes {stable_mosaic.version = 11 : i64} {
  func.func @_linear_block_kernel(%arg0: memref<2x2xf32, #tpu.memory_space<vmem>>, %arg1: memref<2x3xf32, #tpu.memory_space<vmem>>, %arg2: memref<1x3xf32, #tpu.memory_space<vmem>>, %arg3: memref<2x3xf32, #tpu.memory_space<vmem>>) attributes {dimension_semantics = [], scalar_prefetch = 0 : i64, scratch_operands = 0 : i64, tpu.core_type = #tpu.core_type<tc>} {
    %c0 = arith.constant 0 : index
    %c0_0 = arith.constant 0 : index
    %0 = vector.load %arg0[%c0, %c0_0] : memref<2x2xf32, #tpu.memory_space<vmem>>, vector<2x2xf32>
    %c0_1 = arith.constant 0 : index
    %c0_2 = arith.constant 0 : index
    %1 = vector.load %arg1[%c0_1, %c0_2] : memref<2x3xf32, #tpu.memory_space<vmem>>, vector<2x3xf32>
    %cst = arith.constant dense<0.000000e+00> : vector<2x3xf32>
    %2 = tpu.matmul %0, %1, %cst {dimension_numbers = #tpu.dot_dimension_numbers<[1], [0], [0], [1], [0, 0, 1, 1], [], []>} : vector<2x2xf32>, vector<2x3xf32>, vector<2x3xf32> -> vector<2x3xf32>
    %c0_3 = arith.constant 0 : index
    %c0_4 = arith.constant 0 : index
    %3 = vector.load %arg2[%c0_3, %c0_4] : memref<1x3xf32, #tpu.memory_space<vmem>>, vector<1x3xf32>
    %4 = vector.broadcast %3 : vector<1x3xf32> to vector<2x3xf32>
    %5 = arith.addf %2, %4 : vector<2x3xf32>
    %c0_5 = arith.constant 0 : index
    %c0_6 = arith.constant 0 : index
    %6 = vector.load %arg3[%c0_5, %c0_6] : memref<2x3xf32, #tpu.memory_space<vmem>>, vector<2x3xf32>
    tpu.vector_store %arg3[%c0_5, %c0_6], %5 {strides = array<i32>} : memref<2x3xf32, #tpu.memory_space<vmem>>, vector<2x3xf32>,
    return
  }
}

</mosaic_0001>

<llo_original>
// kernel: tpu_custom_call.1
$region0: #{tpu_custom_call.1}
  #allocation0 [shape = 'u32[]', space=smem, size = 0x4, offset = 0x4, fixed_abs, tag = 'smem constant byte address 0x4 - core index']
  #allocation1 [shape = 'u32[144,128]{1,0:T(1,128)}', space=vmem, size = 0x12000, scoped, tag = 'internal scratch']
  %s0 = inlined_call_operand.hbm [shape: f32[2,2], index: 0, kind: input, shape index: {}]
  %s1 = inlined_call_operand.vmem [shape: f32[2,3], index: 1, kind: input, shape index: {}]
  %s2 = inlined_call_operand.vmem [shape: f32[1,3], index: 2, kind: input, shape index: {}]
  %s3 = inlined_call_operand.hbm [shape: f32[2,3], index: 3, kind: output, shape index: {}]
  %s4 = sld [smem:[#allocation0]]
  $region26: #{tpu_custom_call.1} parent=0
    _
  %s6 = ssub.s32 1, %s4
  %s7 = scalar_select 0, %s6, %s4
  $region1: #{tpu_custom_call.1} parent=0
    #allocation2 [shape = 'u8[1024]{0}', space=vmem, size = 0x400, scoped, tag = 'input window, operand 0, single buffered']
    #allocation3 [shape = 's32[1]{0}', space=sflag, size = 0x4, scoped, tag = 'scoped memory for tpu_custom_call.1']
    #allocation4 [shape = 's32[1]{0}', space=sflag, size = 0x4, scoped, tag = 'scoped memory for tpu_custom_call.1']
    #allocation5 [shape = 'u8[1024]{0}', space=vmem, size = 0x400, scoped, tag = 'output window, operand 0, single buffered']
    %8 = vsyncpa [#allocation3], 0
    %9 = vsyncpa [#allocation4], 0
    // Predicated region
    $region2: #{tpu_custom_call.1} parent=1 // pred_check
      _
    $region3: #{tpu_custom_call.1} parent=1 // pred_check_branch
      %11 = sbr.rel (0) target = $region5
    $region4: #{tpu_custom_call.1} parent=1 // pred_region
      %s13 = ssub.s32 32, 32
      %14 = vsyncadd [#allocation3], %s13
      %s16 = sshll.u32 [#allocation2], 4
      %s17 = int_to_ptr.vmem [resolvable:$true] %s16
      %19 = dma.hbm_to_vmem [thread:$0]  %s0, 32, %s17, [#allocation3]
    $region5: #{tpu_custom_call.1} parent=1 // pred_fallthru
      _
    // Predicated region
    $region6: #{tpu_custom_call.1} parent=1 // pred_check
      _
    $region7: #{tpu_custom_call.1} parent=1 // pred_check_branch
      %21 = sbr.rel (0) target = $region9
    $region8: #{tpu_custom_call.1} parent=1 // pred_region
      _
    $region9: #{tpu_custom_call.1} parent=1 // pred_fallthru
      _
    // Predicated region
    $region10: #{tpu_custom_call.1} parent=1 // pred_check
      _
    $region11: #{tpu_custom_call.1} parent=1 // pred_check_branch
      %23 = sbr.rel (0) target = $region13
    $region12: #{tpu_custom_call.1} parent=1 // pred_region
      _
    $region13: #{tpu_custom_call.1} parent=1 // pred_fallthru
      _
    // Predicated region
    $region14: #{tpu_custom_call.1} parent=1 // pred_check
      _
    $region15: #{tpu_custom_call.1} parent=1 // pred_check_branch
      %25 = sbr.rel (0) target = $region17
    $region16: #{tpu_custom_call.1} parent=1 // pred_region
      %26 = dma.done [#allocation3], 32
    $region17: #{tpu_custom_call.1} parent=1 // pred_fallthru
      _
    %v27 = vld [vmem:[#allocation2] sm:$0x3]
    %v28 = vld [vmem:[%s1] sm:$0x3]
    %v29 = vld [vmem:[%s2] sm:$0x1]
    %v31 = vlaneseq
    %v32 = vshrl.u32 %v31, 7
    %v33 = vsub.s32 0, %v32
    %v34 = vrot.slane %v29, %v33
    %vm36 = vcmask 15360
    %v38 = vsel %vm36, %v27, 0
    %vm40 = vcmask 1041408
    %v42 = vsel %vm40, %v28, 0
    %44 = vmatprep.subr.mxu0 0.0
    %45 = vmatpush1.msra.mxu0 %v42
    %46 = vmatprep.subr.mxu0 0.0
    %47 = vmatpush1.msra.mxu0 0.0
    %48 = vmatprep.subr.mxu0 0.0
    %49 = vmatpush1.msra.mxu0 0.0
    %50 = vmatprep.subr.mxu0 0.0
    %51 = vmatpush1.msra.mxu0 0.0
    %52 = vmatprep.subr.mxu0 0.0
    %53 = vmatpush1.msra.mxu0 0.0
    %54 = vmatprep.subr.mxu0 0.0
    %55 = vmatpush1.msra.mxu0 0.0
    %56 = vmatprep.subr.mxu0 0.0
    %57 = vmatpush1.msra.mxu0 0.0
    %58 = vmatprep.subr.mxu0 0.0
    %59 = vmatpush1.msra.mxu0 0.0
    %60 = vmatprep.subr.mxu0 0.0
    %61 = vmatpush1.msra.mxu0 0.0
    %62 = vmatprep.subr.mxu0 0.0
    %63 = vmatpush1.msra.mxu0 0.0
    %64 = vmatprep.subr.mxu0 0.0
    %65 = vmatpush1.msra.mxu0 0.0
    %66 = vmatprep.subr.mxu0 0.0
    %67 = vmatpush1.msra.mxu0 0.0
    %68 = vmatprep.subr.mxu0 0.0
    %69 = vmatpush1.msra.mxu0 0.0
    %70 = vmatprep.subr.mxu0 0.0
    %71 = vmatpush1.msra.mxu0 0.0
    %72 = vmatprep.subr.mxu0 0.0
    %73 = vmatpush1.msra.mxu0 0.0
    %74 = vmatprep.subr.mxu0 0.0
    %75 = vmatpush1.msra.mxu0 0.0
    %76 = vmatprep.subr.mxu0 0.0
    %77 = vmatpush1.msra.mxu0 0.0
    %78 = vmatprep.subr.mxu0 0.0
    %79 = vmatpush1.msra.mxu0 0.0
    %80 = vmatprep.subr.mxu0 0.0
    %81 = vmatpush1.msra.mxu0 0.0
    %82 = vmatprep.subr.mxu0 0.0
    %83 = vmatpush1.msra.mxu0 0.0
    %84 = vmatprep.subr.mxu0 0.0
    %85 = vmatpush1.msra.mxu0 0.0
    %86 = vmatprep.subr.mxu0 0.0
    %87 = vmatpush1.msra.mxu0 0.0
    %88 = vmatprep.subr.mxu0 0.0
    %89 = vmatpush1.msra.mxu0 0.0
    %90 = vmatprep.subr.mxu0 0.0
    %91 = vmatpush1.msra.mxu0 0.0
    %92 = vmatprep.subr.mxu0 0.0
    %93 = vmatpush1.msra.mxu0 0.0
    %94 = vmatprep.subr.mxu0 0.0
    %95 = vmatpush1.msra.mxu0 0.0
    %96 = vmatprep.subr.mxu0 0.0
    %97 = vmatpush1.msra.mxu0 0.0
    %98 = vmatprep.subr.mxu0 0.0
    %99 = vmatpush1.msra.mxu0 0.0
    %100 = vmatprep.subr.mxu0 0.0
    %101 = vmatpush1.msra.mxu0 0.0
    %102 = vmatprep.subr.mxu0 0.0
    %103 = vmatpush1.msra.mxu0 0.0
    %104 = vmatprep.subr.mxu0 0.0
    %105 = vmatpush1.msra.mxu0 0.0
    %106 = vmatprep.subr.mxu0 0.0
    %107 = vmatpush1.msra.mxu0 0.0
    %108 = vmatprep.mubr.f32.mxu0 0.0
    %109 = vmatmul.mubr.f32.gmra.mrb[0].mxu0 %v38
    %v110 = vpop.f32.mrb[0].mxu0
    %v111 = vadd.f32 %v34, %v110
    %v112 = vpop.f32.mrb[0].mxu0
    %113 = vdwg.mxu0
    %vm114 = vcmask 17408
    %115 = vst.msk [vmem:[#allocation5] sm:$0x3] %vm114, %v111
    // Predicated region
    $region18: #{tpu_custom_call.1} parent=1 // pred_check
      _
    $region19: #{tpu_custom_call.1} parent=1 // pred_check_branch
      %117 = sbr.rel (0) target = $region21
    $region20: #{tpu_custom_call.1} parent=1 // pred_region
      %s119 = ssub.s32 32, 32
      %120 = vsyncadd [#allocation4], %s119
      %s122 = sshll.u32 [#allocation5], 4
      %s123 = int_to_ptr.vmem [resolvable:$true] %s122
      %125 = dma.vmem_to_hbm [thread:$0]  %s123, 32, %s3, [#allocation4]
    $region21: #{tpu_custom_call.1} parent=1 // pred_fallthru
      _
    // Predicated region
    $region22: #{tpu_custom_call.1} parent=1 // pred_check
      _
    $region23: #{tpu_custom_call.1} parent=1 // pred_check_branch
      %127 = sbr.rel (0) target = $region25
    $region24: #{tpu_custom_call.1} parent=1 // pred_region
      %128 = dma.done [#allocation4], 32
    $region25: #{tpu_custom_call.1} parent=1 // pred_fallthru
      _
    %129 = vsyncpa [#allocation3], 1
    %130 = vsyncpa [#allocation4], 1

</llo_original>
